<compile_context>
chip_gen: v7x
topology: tpu7x:2x2x1
jax: 0.10.0
libtpu: 0.0.40
codegen_flags: <defaults>
</compile_context>

<pallas_src>
import math

import jax
import jax.numpy as jnp
from jax.experimental import pallas as pl
from jax.experimental.pallas import tpu as pltpu

LANE = 128
MAX_TILE_S = 512  # sublane rows per block -> 512*128 f32 = 256 KiB per buffer


def _round_up(x, m):
    return ((x + m - 1) // m) * m


def elu_bias_kernel(b_ref, x_ref, o_ref):
    # b_ref: SMEM (dim,) f32 ; x_ref/o_ref: VMEM (1, tile_s, 128)
    d = pl.program_id(0)
    x = x_ref[...].astype(jnp.float32) + b_ref[d]
    # ELU (alpha = 1). Clamp the exp argument so the untaken branch stays finite.
    neg = jnp.exp(jnp.minimum(x, 0.0)) - 1.0
    o_ref[...] = jnp.where(x > 0.0, x, neg).astype(o_ref.dtype)


def _apply_elu_bias(x, bias):
    """elu(x + bias) with `bias` (shape (dim,)) broadcast along x's last axis."""
    orig_shape = x.shape
    dim = orig_shape[-1]
    R = math.prod(orig_shape[:-1])

    S = (R + LANE - 1) // LANE                 # sublane rows needed
    tile_s = min(MAX_TILE_S, _round_up(S, 8))  # multiple of 8
    S_pad = _round_up(S, tile_s)
    R_pad = S_pad * LANE

    # Lane-dense slab: component axis leading, big flattened axis on lanes.
    xt = x.reshape(R, dim).T                   # (dim, R)
    xt = jnp.pad(xt, ((0, 0), (0, R_pad - R)))
    xt = xt.reshape(dim, S_pad, LANE)

    grid = (dim, S_pad // tile_s)

    out = pl.pallas_call(
        elu_bias_kernel,
        out_shape=jax.ShapeDtypeStruct((dim, S_pad, LANE), x.dtype),
        grid_spec=pltpu.PrefetchScalarGridSpec(
            num_scalar_prefetch=0,
            grid=grid,
            in_specs=[
                pl.BlockSpec(memory_space=pltpu.MemorySpace.SMEM),        # bias
                pl.BlockSpec((1, tile_s, LANE), lambda d, i: (d, i, 0)),  # x slab
            ],
            out_specs=pl.BlockSpec((1, tile_s, LANE), lambda d, i: (d, i, 0)),
        ),
        compiler_params=pltpu.CompilerParams(
            dimension_semantics=("parallel", "parallel")),
    )(bias.astype(jnp.float32), xt)

    out = out.reshape(dim, R_pad)[:, :R].T.reshape(orig_shape)
    return out


def nonlinearity_forward(input_tensor_list, biases0, biases1, biases2):
    """Forward of the PyTorch `Nonlinearity` module (nonlin = ELU)."""
    bias_by_dim = {1: biases0, 3: biases1, 5: biases2}
    m_by_dim = {1: 0, 3: 1, 5: 2}
    output_tensor_list = {0: [], 1: [], 2: []}
    for key in input_tensor_list:
        for tensor in input_tensor_list[key]:
            dim = tensor.shape[-1]
            t_out = _apply_elu_bias(tensor, bias_by_dim[dim])
            t_out = jnp.expand_dims(t_out, 1)        # .unsqueeze(1)
            output_tensor_list[m_by_dim[dim]].append(t_out)
    return output_tensor_list


def _reference_forward(input_tensor_list, biases0, biases1, biases2):
    bias_by_dim = {1: biases0, 3: biases1, 5: biases2}
    m_by_dim = {1: 0, 3: 1, 5: 2}
    out = {0: [], 1: [], 2: []}
    for key in input_tensor_list:
        for t in input_tensor_list[key]:
            dim = t.shape[-1]
            x = t + bias_by_dim[dim]                 # broadcast along last axis
            y = jnp.where(x > 0, x, jnp.expm1(x))    # F.elu, alpha = 1
            out[m_by_dim[dim]].append(jnp.expand_dims(y, 1))
    return out


if __name__ == "__main__":
    key = jax.random.PRNGKey(0)
    k0, k1a, k1b, k2, kb0, kb1, kb2 = jax.random.split(key, 7)

    # Small shapes: [batch, atoms, channels, 2l+1] for l = 0, 1, 2.
    input_tensor_list = {
        0: [jax.random.normal(k0, (2, 8, 4, 1), jnp.float32)],
        1: [jax.random.normal(k1a, (2, 8, 4, 3), jnp.float32),
            jax.random.normal(k1b, (2, 7, 4, 3), jnp.float32)],
        2: [jax.random.normal(k2, (2, 8, 4, 5), jnp.float32)],
    }

    # The module initializes biases to 0.0; use nonzero values here so the
    # bias-broadcast path of the kernel is actually exercised.
    biases0 = 0.1 * jax.random.normal(kb0, (1,), jnp.float32)
    biases1 = 0.1 * jax.random.normal(kb1, (3,), jnp.float32)
    biases2 = 0.1 * jax.random.normal(kb2, (5,), jnp.float32)

    out = nonlinearity_forward(input_tensor_list, biases0, biases1, biases2)
    out = jax.block_until_ready(out)

    ref = _reference_forward(input_tensor_list, biases0, biases1, biases2)
    for m in (0, 1, 2):
        assert len(out[m]) == len(ref[m]), (m, len(out[m]), len(ref[m]))
        for got, want in zip(out[m], ref[m]):
            assert got.shape == want.shape, (got.shape, want.shape)
            assert jnp.allclose(got, want, atol=1e-5, rtol=1e-5), f"mismatch in m={m}"

    print("KERNEL_OK")
</pallas_src>

<mosaic_0001>
module attributes {stable_mosaic.version = 11 : i64} {
  func.func @elu_bias_kernel(%arg0: i32, %arg1: i32, %arg2: memref<1xf32, #tpu.memory_space<smem>>, %arg3: memref<1x8x128xf32, #tpu.memory_space<vmem>>, %arg4: memref<1x8x128xf32, #tpu.memory_space<vmem>>) attributes {dimension_semantics = [#tpu.dimension_semantics<parallel>, #tpu.dimension_semantics<parallel>], iteration_bounds = array<i64: 1, 1>, scalar_prefetch = 0 : i64, scratch_operands = 0 : i64, tpu.core_type = #tpu.core_type<tc>, window_params = [{transform_indices = @transform_0, window_bounds = array<i64: 1>}, {transform_indices = @transform_1, window_bounds = array<i64: 1, 8, 128>}, {transform_indices = @transform_2, window_bounds = array<i64: 1, 8, 128>}]} {
    %c0 = arith.constant 0 : index
    %c0_0 = arith.constant 0 : index
    %c0_1 = arith.constant 0 : index
    %0 = vector.load %arg3[%c0, %c0_0, %c0_1] : memref<1x8x128xf32, #tpu.memory_space<vmem>>, vector<1x8x128xf32>
    %1 = arith.index_cast %arg0 : i32 to index
    %2 = memref.load %arg2[%1] : memref<1xf32, #tpu.memory_space<smem>>
    %3 = vector.broadcast %2 : f32 to vector<1x8x128xf32>
    %4 = arith.addf %0, %3 : vector<1x8x128xf32>
    %cst = arith.constant 0.000000e+00 : f32
    %5 = vector.broadcast %cst : f32 to vector<1x8x128xf32>
    %6 = arith.minimumf %4, %5 : vector<1x8x128xf32>
    %7 = math.exp %6 : vector<1x8x128xf32>
    %cst_2 = arith.constant 1.000000e+00 : f32
    %8 = vector.broadcast %cst_2 : f32 to vector<1x8x128xf32>
    %9 = arith.subf %7, %8 : vector<1x8x128xf32>
    %cst_3 = arith.constant 0.000000e+00 : f32
    %10 = vector.broadcast %cst_3 : f32 to vector<1x8x128xf32>
    %11 = arith.cmpf ogt, %4, %10 : vector<1x8x128xf32>
    %12 = arith.select %11, %4, %9 : vector<1x8x128xi1>, vector<1x8x128xf32>
    %c0_4 = arith.constant 0 : index
    %c0_5 = arith.constant 0 : index
    %c0_6 = arith.constant 0 : index
    %13 = vector.load %arg4[%c0_4, %c0_5, %c0_6] : memref<1x8x128xf32, #tpu.memory_space<vmem>>, vector<1x8x128xf32>
    tpu.vector_store %arg4[%c0_4, %c0_5, %c0_6], %12 {strides = array<i32>} : memref<1x8x128xf32, #tpu.memory_space<vmem>>, vector<1x8x128xf32>,
    return
  }
  func.func @transform_0(%arg0: i32, %arg1: i32) -> i32 {
    %c0_i32 = arith.constant 0 : i32
    %c0_i32_0 = arith.constant 0 : i32
    return %c0_i32 : i32
  }
  func.func @transform_1(%arg0: i32, %arg1: i32) -> (i32, i32, i32) {
    %c0_i32 = arith.constant 0 : i32
    %c0_i32_0 = arith.constant 0 : i32
    return %arg0, %arg1, %c0_i32 : i32, i32, i32
  }
  func.func @transform_2(%arg0: i32, %arg1: i32) -> (i32, i32, i32) {
    %c0_i32 = arith.constant 0 : i32
    %c0_i32_0 = arith.constant 0 : i32
    return %arg0, %arg1, %c0_i32 : i32, i32, i32
  }
}

</mosaic_0001>

<llo_original>
// kernel: tpu_custom_call.1
$region0: #{tpu_custom_call.1}
  #allocation0 [shape = 'u32[]', space=smem, size = 0x4, offset = 0x4, fixed_abs, tag = 'smem constant byte address 0x4 - core index']
  #allocation1 [shape = 'u32[144,128]{1,0:T(1,128)}', space=vmem, size = 0x12000, scoped, tag = 'internal scratch']
  #allocation2 [shape = 'f32[1]{0:T(128)S(6)}', space=smem, size = 0x200, scoped, tag = 'scoped memory for tpu_custom_call.1']
  %s0 = inlined_call_operand.<no memory space> [shape: f32[1], index: 0, kind: input, shape index: {}]
  %s1 = inlined_call_operand.hbm [shape: f32[1,8,128], index: 1, kind: input, shape index: {}]
  %s2 = inlined_call_operand.hbm [shape: f32[1,8,128], index: 2, kind: output, shape index: {}]
  %s3 = sld [smem:[#allocation0]]
  $region22: #{tpu_custom_call.1} parent=0
    _
  %s5 = ssub.s32 1, %s3
  %s6 = scalar_select 0, %s5, %s3
  %7 = sst [smem:[#allocation2]] %s0
  $region1: #{tpu_custom_call.1} parent=0
    #allocation3 [shape = 'u8[4096]{0}', space=vmem, size = 0x1000, scoped, tag = 'input window, operand 1, single buffered']
    #allocation4 [shape = 's32[1]{0}', space=sflag, size = 0x4, scoped, tag = 'scoped memory for tpu_custom_call.1']
    #allocation5 [shape = 's32[1]{0}', space=sflag, size = 0x4, scoped, tag = 'scoped memory for tpu_custom_call.1']
    #allocation6 [shape = 'u8[4096]{0}', space=vmem, size = 0x1000, scoped, tag = 'output window, operand 0, single buffered']
    %8 = vsyncpa [#allocation4], 0
    %9 = vsyncpa [#allocation5], 0
    // Predicated region
    $region2: #{tpu_custom_call.1} parent=1 // pred_check
      _
    $region3: #{tpu_custom_call.1} parent=1 // pred_check_branch
      %11 = sbr.rel (0) target = $region5
    $region4: #{tpu_custom_call.1} parent=1 // pred_region
      _
    $region5: #{tpu_custom_call.1} parent=1 // pred_fallthru
      _
    // Predicated region
    $region6: #{tpu_custom_call.1} parent=1 // pred_check
      _
    $region7: #{tpu_custom_call.1} parent=1 // pred_check_branch
      %13 = sbr.rel (0) target = $region9
    $region8: #{tpu_custom_call.1} parent=1 // pred_region
      %s15 = ssub.s32 128, 128
      %16 = vsyncadd [#allocation4], %s15
      %s18 = sshll.u32 [#allocation3], 4
      %s19 = int_to_ptr.vmem [resolvable:$true] %s18
      %21 = dma.hbm_to_vmem [thread:$0]  %s1, 128, %s19, [#allocation4]
    $region9: #{tpu_custom_call.1} parent=1 // pred_fallthru
      _
    // Predicated region
    $region10: #{tpu_custom_call.1} parent=1 // pred_check
      _
    $region11: #{tpu_custom_call.1} parent=1 // pred_check_branch
      %23 = sbr.rel (0) target = $region13
    $region12: #{tpu_custom_call.1} parent=1 // pred_region
      %24 = dma.done [#allocation4], 128
    $region13: #{tpu_custom_call.1} parent=1 // pred_fallthru
      _
    %v25 = vld [vmem:[#allocation3] sm:$0xff]
    %s26 = sld [smem:[#allocation2]]
    %v27 = vstv %s26
    %v28 = vadd.f32 %v25, %v27
    %v29 = vmin.f32 %v28, 0.0
    %v30 = vmul.f32 %v29, 1.442695
    %v31 = vpow.pop %v30
    %v32 = vsub.f32 %v31, 1.0
    %vm33 = vcmp.gt.f32.partialorder %v28, 0.0
    %v34 = vsel %vm33, %v28, %v32
    %35 = vst [vmem:[#allocation6] sm:$0xff] %v34
    // Predicated region
    $region14: #{tpu_custom_call.1} parent=1 // pred_check
      _
    $region15: #{tpu_custom_call.1} parent=1 // pred_check_branch
      %37 = sbr.rel (0) target = $region17
    $region16: #{tpu_custom_call.1} parent=1 // pred_region
      %s39 = ssub.s32 128, 128
      %40 = vsyncadd [#allocation5], %s39
      %s42 = sshll.u32 [#allocation6], 4
      %s43 = int_to_ptr.vmem [resolvable:$true] %s42
      %45 = dma.vmem_to_hbm [thread:$0]  %s43, 128, %s2, [#allocation5]
    $region17: #{tpu_custom_call.1} parent=1 // pred_fallthru
      _
    // Predicated region
    $region18: #{tpu_custom_call.1} parent=1 // pred_check
      _
    $region19: #{tpu_custom_call.1} parent=1 // pred_check_branch
      %47 = sbr.rel (0) target = $region21
    $region20: #{tpu_custom_call.1} parent=1 // pred_region
      %48 = dma.done [#allocation5], 128
    $region21: #{tpu_custom_call.1} parent=1 // pred_fallthru
      _
    %49 = vsyncpa [#allocation4], 1
    %50 = vsyncpa [#allocation5], 1

</llo_original>
